<compile_context>
chip_gen: v7x
topology: tpu7x:2x2x1
jax: 0.10.0
libtpu: 0.0.40
codegen_flags: <defaults>
</compile_context>

<pallas_src>
import math
from functools import partial

import jax
import jax.numpy as jnp
from jax import lax
from jax.experimental import pallas as pl
from jax.experimental.pallas import tpu as pltpu

_VMEM_LIMIT = 32 * 1024 * 1024  # safe on v5e/v6e/v7x (v7x physical VMEM is 64 MiB)


def _pick_tile(dim, target, align):
    """Largest divisor of `dim` <= target that is a multiple of `align`.
    Falls back to the full dim (always a legal Mosaic block)."""
    if dim <= target:
        return dim
    for t in range(target, align - 1, -1):
        if dim % t == 0 and t % align == 0:
            return t
    return dim


# ------------------------------ tiled linear ------------------------------- #

def _linear_kernel(x_ref, w_ref, b_ref, o_ref, acc_ref):
    # Fold the bias into the f32 accumulator at k == 0.
    @pl.when(pl.program_id(2) == 0)
    def _init():
        acc_ref[...] = jnp.broadcast_to(b_ref[...], acc_ref.shape)

    acc_ref[...] += jnp.dot(x_ref[...], w_ref[...],
                            preferred_element_type=jnp.float32)

    @pl.when(pl.program_id(2) == pl.num_programs(2) - 1)
    def _store():
        o_ref[...] = acc_ref[...].astype(o_ref.dtype)


def linear(x, w, b, *, compute_dtype=None, out_dtype=None,
           tm_target=256, tn_target=256, tk_target=512):
    """y = x @ w + b.   x: (M, K), w: (K, N), b: (N,)."""
    M, K = x.shape
    N = w.shape[1]
    if out_dtype is None:
        out_dtype = x.dtype
    # Boundary cast (review): DMA moves narrow bytes, no per-step VPU casts.
    if compute_dtype is not None:
        if x.dtype != compute_dtype:
            x = x.astype(compute_dtype)
        if w.dtype != compute_dtype:
            w = w.astype(compute_dtype)
    tm = _pick_tile(M, tm_target, 8)
    tn = _pick_tile(N, tn_target, 128)
    tk = _pick_tile(K, tk_target, 128)
    grid = (M // tm, N // tn, K // tk)  # reduction axis (K) last
    return pl.pallas_call(
        _linear_kernel,
        out_shape=jax.ShapeDtypeStruct((M, N), out_dtype),
        grid=grid,
        in_specs=[
            pl.BlockSpec((tm, tk), lambda i, j, k: (i, k)),
            pl.BlockSpec((tk, tn), lambda i, j, k: (k, j)),
            pl.BlockSpec((1, tn), lambda i, j, k: (0, j)),
        ],
        out_specs=pl.BlockSpec((tm, tn), lambda i, j, k: (i, j)),
        scratch_shapes=[pltpu.VMEM((tm, tn), jnp.float32)],
        compiler_params=pltpu.CompilerParams(
            dimension_semantics=("parallel", "parallel", "arbitrary"),
            vmem_limit_bytes=_VMEM_LIMIT),
    )(x, w, b.astype(jnp.float32).reshape(1, N))


# ------------------------------ attention core ----------------------------- #

def _attn_weights_kernel(q_ref, k_ref, v_ref, o_ref, p_ref, *, scale):
    # One (batch, head, L-tile) per grid step; full T resident.
    # q_ref: (tL, d_k)  k_ref: (T, d_k)  v_ref: (T, d_v)
    s = lax.dot_general(q_ref[...], k_ref[...], (((1,), (1,)), ((), ())),
                        preferred_element_type=jnp.float32) * scale
    m = jnp.max(s, axis=-1, keepdims=True)
    e = jnp.exp(s - m)
    p = e / jnp.sum(e, axis=-1, keepdims=True)      # exact softmax (rows sum to 1)
    p_ref[...] = p.astype(p_ref.dtype)
    o_ref[...] = jnp.dot(p.astype(v_ref.dtype), v_ref[...],
                         preferred_element_type=jnp.float32).astype(o_ref.dtype)


def _flash_attn_kernel(q_ref, k_ref, v_ref, o_ref, m_sc, l_sc, acc_sc, *, scale):
    # Online softmax over T tiles (grid axis 3, "arbitrary").
    t = pl.program_id(3)

    @pl.when(t == 0)
    def _init():
        m_sc[...] = jnp.full(m_sc.shape, -jnp.inf, m_sc.dtype)
        l_sc[...] = jnp.zeros(l_sc.shape, l_sc.dtype)
        acc_sc[...] = jnp.zeros(acc_sc.shape, acc_sc.dtype)

    s = lax.dot_general(q_ref[...], k_ref[...], (((1,), (1,)), ((), ())),
                        preferred_element_type=jnp.float32) * scale
    m_prev = m_sc[...]
    m_new = jnp.maximum(m_prev, jnp.max(s, axis=-1, keepdims=True))
    alpha = jnp.exp(m_prev - m_new)
    p = jnp.exp(s - m_new)
    l_sc[...] = alpha * l_sc[...] + jnp.sum(p, axis=-1, keepdims=True)
    acc_sc[...] = alpha * acc_sc[...] + jnp.dot(
        p.astype(v_ref.dtype), v_ref[...], preferred_element_type=jnp.float32)
    m_sc[...] = m_new

    @pl.when(t == pl.num_programs(3) - 1)
    def _store():
        o_ref[...] = (acc_sc[...] / l_sc[...]).astype(o_ref.dtype)


def attention_core(q, k, v, *, return_attn, attn_dtype=jnp.float32,
                   l_tile_target=256, t_tile_target=512):
    """q: (B,H,L,d_k), k: (B,H,T,d_k), v: (B,H,T,d_v)
       -> o (B,H,L,d_v)  [, attn (H,B,L,T)]"""
    B, H, L, d_k = q.shape
    T = k.shape[2]
    d_v = v.shape[3]
    scale = 1.0 / math.sqrt(d_k)
    tl = _pick_tile(L, l_tile_target, 8)

    if return_attn:
        # Exact softmax; the (H,B,L,T) weights output is inherently O(L*T).
        o, attn = pl.pallas_call(
            partial(_attn_weights_kernel, scale=scale),
            out_shape=(jax.ShapeDtypeStruct((B, H, L, d_v), q.dtype),
                       jax.ShapeDtypeStruct((H, B, L, T), attn_dtype)),
            grid=(B, H, L // tl),
            in_specs=[
                pl.BlockSpec((None, None, tl, d_k), lambda b, h, l: (b, h, l, 0)),
                pl.BlockSpec((None, None, T, d_k), lambda b, h, l: (b, h, 0, 0)),
                pl.BlockSpec((None, None, T, d_v), lambda b, h, l: (b, h, 0, 0)),
            ],
            out_specs=(
                pl.BlockSpec((None, None, tl, d_v), lambda b, h, l: (b, h, l, 0)),
                pl.BlockSpec((None, None, tl, T), lambda b, h, l: (h, b, l, 0)),
            ),
            compiler_params=pltpu.CompilerParams(
                dimension_semantics=("parallel", "parallel", "parallel"),
                vmem_limit_bytes=_VMEM_LIMIT),
        )(q, k, v)
        return o, attn

    # Fast path: flash-style online softmax, nothing quadratic materialized.
    tt = _pick_tile(T, t_tile_target, 8)
    o = pl.pallas_call(
        partial(_flash_attn_kernel, scale=scale),
        out_shape=jax.ShapeDtypeStruct((B, H, L, d_v), q.dtype),
        grid=(B, H, L // tl, T // tt),
        in_specs=[
            pl.BlockSpec((None, None, tl, d_k), lambda b, h, l, t: (b, h, l, 0)),
            pl.BlockSpec((None, None, tt, d_k), lambda b, h, l, t: (b, h, t, 0)),
            pl.BlockSpec((None, None, tt, d_v), lambda b, h, l, t: (b, h, t, 0)),
        ],
        out_specs=pl.BlockSpec((None, None, tl, d_v),
                               lambda b, h, l, t: (b, h, l, 0)),
        scratch_shapes=[pltpu.VMEM((tl, 1), jnp.float32),
                        pltpu.VMEM((tl, 1), jnp.float32),
                        pltpu.VMEM((tl, d_v), jnp.float32)],
        compiler_params=pltpu.CompilerParams(
            dimension_semantics=("parallel", "parallel", "parallel", "arbitrary"),
            vmem_limit_bytes=_VMEM_LIMIT),
    )(q, k, v)
    return o, None


# ------------------------------- model wrapper ----------------------------- #

def init_params(key, d_model, n_heads):
    d_k = d_model // n_heads
    d_v = d_model // n_heads
    ks = jax.random.split(key, 8)
    std_qk = math.sqrt(2.0 / (d_model + d_k))
    std_v = math.sqrt(2.0 / (d_model + d_v))
    std_fc = math.sqrt(2.0 / (n_heads * d_v + d_model))      # xavier_normal_
    bnd_in = 1.0 / math.sqrt(d_model)                         # torch Linear bias init
    bnd_fc = 1.0 / math.sqrt(n_heads * d_v)
    f32 = jnp.float32
    p = {
        # weights stored as (in, out) so forward is x @ W
        "w_q": jax.random.normal(ks[0], (d_model, n_heads * d_k), f32) * std_qk,
        "b_q": jax.random.uniform(ks[1], (n_heads * d_k,), f32, -bnd_in, bnd_in),
        "w_k": jax.random.normal(ks[2], (d_model, n_heads * d_k), f32) * std_qk,
        "b_k": jax.random.uniform(ks[3], (n_heads * d_k,), f32, -bnd_in, bnd_in),
        "w_v": jax.random.normal(ks[4], (d_model, n_heads * d_v), f32) * std_v,
        "b_v": jax.random.uniform(ks[5], (n_heads * d_v,), f32, -bnd_in, bnd_in),
        "w_fc": jax.random.normal(ks[6], (n_heads * d_v, d_model), f32) * std_fc,
        "b_fc": jax.random.uniform(ks[7], (d_model,), f32, -bnd_fc, bnd_fc),
    }
    # Pre-concatenated weights so self-attention runs Q/K/V as ONE GEMM.
    p["w_qkv"] = jnp.concatenate([p["w_q"], p["w_k"], p["w_v"]], axis=1)
    p["b_qkv"] = jnp.concatenate([p["b_q"], p["b_k"], p["b_v"]], axis=0)
    return p


def multi_head_attention(query, key, value, params, n_heads, *,
                         return_attn=True, compute_dtype=None,
                         attn_dtype=jnp.float32):
    """Forward pass (mask=None, dropout in eval mode).

    compute_dtype=jnp.bfloat16 casts matmul operands at the boundary for MXU
    peak on v6e/v7x; softmax stats and all accumulation stay f32.
    Note: the fused-QKV dispatch uses Python object identity of query/key/value."""
    B, L, d_model = query.shape
    T = key.shape[1]
    d_k = params["w_q"].shape[1] // n_heads
    d_v = params["w_v"].shape[1] // n_heads
    hk, hv = n_heads * d_k, n_heads * d_v
    cdt = compute_dtype if compute_dtype is not None else query.dtype

    if query is key and key is value and "w_qkv" in params:
        # Self-attention: fused Q/K/V projection, one tiled GEMM.
        qkv = linear(query.reshape(B * L, d_model), params["w_qkv"],
                     params["b_qkv"], compute_dtype=cdt, out_dtype=cdt)
        q2, k2, v2 = qkv[:, :hk], qkv[:, hk:2 * hk], qkv[:, 2 * hk:]
    else:
        q2 = linear(query.reshape(B * L, d_model), params["w_q"], params["b_q"],
                    compute_dtype=cdt, out_dtype=cdt)
        k2 = linear(key.reshape(B * T, d_model), params["w_k"], params["b_k"],
                    compute_dtype=cdt, out_dtype=cdt)
        v2 = linear(value.reshape(B * T, d_model), params["w_v"], params["b_v"],
                    compute_dtype=cdt, out_dtype=cdt)

    # Head-major (B, H, L, d) layout: each attention block's last dim is the full
    # head dim (lane-dense, always (8,128)-legal) and the grid parallelizes over
    # batch, head and L tiles.  The relayout is a cheap bandwidth-bound XLA op.
    qh = q2.reshape(B, L, n_heads, d_k).transpose(0, 2, 1, 3)
    kh = k2.reshape(B, T, n_heads, d_k).transpose(0, 2, 1, 3)
    vh = v2.reshape(B, T, n_heads, d_v).transpose(0, 2, 1, 3)

    o, attn = attention_core(qh, kh, vh, return_attn=return_attn,
                             attn_dtype=attn_dtype)

    o_flat = o.transpose(0, 2, 1, 3).reshape(B * L, hv)
    out = linear(o_flat, params["w_fc"], params["b_fc"],
                 compute_dtype=cdt, out_dtype=query.dtype).reshape(B, L, d_model)
    # TODO(synk): dropout is identity (eval mode).
    return out, attn


def _reference(query, key, value, params, n_heads):
    """Pure-JAX reference for correctness checking."""
    B, L, d_model = query.shape
    T = key.shape[1]
    d_k = params["w_q"].shape[1] // n_heads
    d_v = params["w_v"].shape[1] // n_heads
    q = (query @ params["w_q"] + params["b_q"]).reshape(B, L, n_heads, d_k).transpose(2, 0, 1, 3)
    k = (key @ params["w_k"] + params["b_k"]).reshape(B, T, n_heads, d_k).transpose(2, 0, 1, 3)
    v = (value @ params["w_v"] + params["b_v"]).reshape(B, T, n_heads, d_v).transpose(2, 0, 1, 3)
    attn = jnp.einsum("hblk,hbtk->hblt", q, k) / math.sqrt(d_k)
    attn = jax.nn.softmax(attn, axis=3)
    o = jnp.einsum("hblt,hbtv->hblv", attn, v)
    o = o.transpose(1, 2, 0, 3).reshape(B, L, n_heads * d_v)
    out = o @ params["w_fc"] + params["b_fc"]
    return out, attn


# ---------------------------------- main ----------------------------------- #

if __name__ == "__main__":
    d_model, n_heads = 32, 4
    B, L, T = 2, 8, 8

    root = jax.random.PRNGKey(0)
    kp, kq, kk, kv = jax.random.split(root, 4)
    params = init_params(kp, d_model, n_heads)

    query = jax.random.normal(kq, (B, L, d_model), jnp.float32)
    key = jax.random.normal(kk, (B, T, d_model), jnp.float32)
    value = jax.random.normal(kv, (B, T, d_model), jnp.float32)

    ref_out, ref_attn = _reference(query, key, value, params, n_heads)

    # 1) Cross-attention with attention weights (exact-softmax kernel).
    out, attn = multi_head_attention(query, key, value, params, n_heads)
    jax.block_until_ready((out, attn))
    assert out.shape == (B, L, d_model)
    assert attn.shape == (n_heads, B, L, T)
    assert jnp.allclose(out, ref_out, atol=2e-3, rtol=2e-3)
    assert jnp.allclose(attn, ref_attn, atol=2e-3, rtol=2e-3)

    # 2) Self-attention exercises the fused-QKV projection path.
    out_sa, attn_sa = multi_head_attention(query, query, query, params, n_heads)
    jax.block_until_ready((out_sa, attn_sa))
    ref_out_sa, ref_attn_sa = _reference(query, query, query, params, n_heads)
    assert jnp.allclose(out_sa, ref_out_sa, atol=2e-3, rtol=2e-3)
    assert jnp.allclose(attn_sa, ref_attn_sa, atol=2e-3, rtol=2e-3)

    # 3) Fast path: no attention weights -> flash-style online softmax over T.
    out_f, attn_f = multi_head_attention(query, key, value, params, n_heads,
                                         return_attn=False)
    jax.block_until_ready(out_f)
    assert attn_f is None
    assert jnp.allclose(out_f, ref_out, atol=2e-3, rtol=2e-3)

    # 4) bf16 compute-dtype smoke test (MXU-peak path on v6e/v7x).
    out_bf, _ = multi_head_attention(query, key, value, params, n_heads,
                                     return_attn=False,
                                     compute_dtype=jnp.bfloat16)
    jax.block_until_ready(out_bf)
    assert out_bf.shape == (B, L, d_model)
    assert bool(jnp.all(jnp.isfinite(out_bf)))

    print("KERNEL_OK")
</pallas_src>

<mosaic_0001>
module attributes {stable_mosaic.version = 11 : i64} {
  func.func @_linear_kernel(%arg0: i32, %arg1: i32, %arg2: i32, %arg3: memref<16x32xf32, #tpu.memory_space<vmem>>, %arg4: memref<32x32xf32, #tpu.memory_space<vmem>>, %arg5: memref<1x32xf32, #tpu.memory_space<vmem>>, %arg6: memref<16x32xf32, #tpu.memory_space<vmem>>, %arg7: memref<16x32xf32, #tpu.memory_space<vmem>>) attributes {dimension_semantics = [#tpu.dimension_semantics<parallel>, #tpu.dimension_semantics<parallel>, #tpu.dimension_semantics<arbitrary>], iteration_bounds = array<i64: 1, 1, 1>, scalar_prefetch = 0 : i64, scratch_operands = 1 : i64, tpu.core_type = #tpu.core_type<tc>, window_params = [{transform_indices = @transform_0, window_bounds = array<i64: 16, 32>}, {transform_indices = @transform_1, window_bounds = array<i64: 32, 32>}, {transform_indices = @transform_2, window_bounds = array<i64: 1, 32>}, {transform_indices = @transform_3, window_bounds = array<i64: 16, 32>}]} {
    %c0_i32 = arith.constant 0 : i32
    %0 = arith.cmpi eq, %arg2, %c0_i32 : i32
    %1 = arith.extui %0 : i1 to i32
    %c0_i32_0 = arith.constant 0 : i32
    %2 = arith.cmpi ne, %1, %c0_i32_0 : i32
    scf.if %2 {
      %c0_10 = arith.constant 0 : index
      %c0_11 = arith.constant 0 : index
      %12 = vector.load %arg5[%c0_10, %c0_11] : memref<1x32xf32, #tpu.memory_space<vmem>>, vector<1x32xf32>
      %13 = vector.shape_cast %12 : vector<1x32xf32> to vector<1x32xf32>
      %14 = vector.broadcast %13 : vector<1x32xf32> to vector<16x32xf32>
      %c0_12 = arith.constant 0 : index
      %c0_13 = arith.constant 0 : index
      %15 = vector.load %arg7[%c0_12, %c0_13] : memref<16x32xf32, #tpu.memory_space<vmem>>, vector<16x32xf32>
      tpu.vector_store %arg7[%c0_12, %c0_13], %14 {strides = array<i32>} : memref<16x32xf32, #tpu.memory_space<vmem>>, vector<16x32xf32>,
    } else {
    }
    %c0 = arith.constant 0 : index
    %c0_1 = arith.constant 0 : index
    %3 = vector.load %arg7[%c0, %c0_1] : memref<16x32xf32, #tpu.memory_space<vmem>>, vector<16x32xf32>
    %c0_2 = arith.constant 0 : index
    %c0_3 = arith.constant 0 : index
    %4 = vector.load %arg3[%c0_2, %c0_3] : memref<16x32xf32, #tpu.memory_space<vmem>>, vector<16x32xf32>
    %c0_4 = arith.constant 0 : index
    %c0_5 = arith.constant 0 : index
    %5 = vector.load %arg4[%c0_4, %c0_5] : memref<32x32xf32, #tpu.memory_space<vmem>>, vector<32x32xf32>
    %cst = arith.constant dense<0.000000e+00> : vector<16x32xf32>
    %6 = tpu.matmul %4, %5, %cst {dimension_numbers = #tpu.dot_dimension_numbers<[1], [0], [0], [1], [0, 0, 1, 1], [], []>} : vector<16x32xf32>, vector<32x32xf32>, vector<16x32xf32> -> vector<16x32xf32>
    %7 = arith.addf %3, %6 : vector<16x32xf32>
    %c0_6 = arith.constant 0 : index
    %c0_7 = arith.constant 0 : index
    %8 = vector.load %arg7[%c0_6, %c0_7] : memref<16x32xf32, #tpu.memory_space<vmem>>, vector<16x32xf32>
    tpu.vector_store %arg7[%c0_6, %c0_7], %7 {strides = array<i32>} : memref<16x32xf32, #tpu.memory_space<vmem>>, vector<16x32xf32>,
    %c0_i32_8 = arith.constant 0 : i32
    %9 = arith.cmpi eq, %arg2, %c0_i32_8 : i32
    %10 = arith.extui %9 : i1 to i32
    %c0_i32_9 = arith.constant 0 : i32
    %11 = arith.cmpi ne, %10, %c0_i32_9 : i32
    scf.if %11 {
      %c0_10 = arith.constant 0 : index
      %c0_11 = arith.constant 0 : index
      %12 = vector.load %arg7[%c0_10, %c0_11] : memref<16x32xf32, #tpu.memory_space<vmem>>, vector<16x32xf32>
      %c0_12 = arith.constant 0 : index
      %c0_13 = arith.constant 0 : index
      %13 = vector.load %arg6[%c0_12, %c0_13] : memref<16x32xf32, #tpu.memory_space<vmem>>, vector<16x32xf32>
      tpu.vector_store %arg6[%c0_12, %c0_13], %12 {strides = array<i32>} : memref<16x32xf32, #tpu.memory_space<vmem>>, vector<16x32xf32>,
    } else {
    }
    return
  }
  func.func @transform_0(%arg0: i32, %arg1: i32, %arg2: i32) -> (i32, i32) {
    %c0_i32 = arith.constant 0 : i32
    return %arg0, %arg2 : i32, i32
  }
  func.func @transform_1(%arg0: i32, %arg1: i32, %arg2: i32) -> (i32, i32) {
    %c0_i32 = arith.constant 0 : i32
    return %arg2, %arg1 : i32, i32
  }
  func.func @transform_2(%arg0: i32, %arg1: i32, %arg2: i32) -> (i32, i32) {
    %c0_i32 = arith.constant 0 : i32
    %c0_i32_0 = arith.constant 0 : i32
    return %c0_i32, %arg1 : i32, i32
  }
  func.func @transform_3(%arg0: i32, %arg1: i32, %arg2: i32) -> (i32, i32) {
    %c0_i32 = arith.constant 0 : i32
    return %arg0, %arg1 : i32, i32
  }
}

</mosaic_0001>

<llo_original>
// kernel: tpu_custom_call.1
$region0: #{tpu_custom_call.1}
  #allocation0 [shape = 'u32[]', space=smem, size = 0x4, offset = 0x4, fixed_abs, tag = 'smem constant byte address 0x4 - core index']
  #allocation1 [shape = 'u32[144,128]{1,0:T(1,128)}', space=vmem, size = 0x12000, scoped, tag = 'internal scratch']
  #allocation2 [shape = 'f32[16,32]{1,0:T(8,128)}', space=vmem, size = 0x2000, scoped, tag = 'scratch operand']
  %s0 = inlined_call_operand.hbm [shape: f32[16,32], index: 0, kind: input, shape index: {}]
  %s1 = inlined_call_operand.hbm [shape: f32[32,32], index: 1, kind: input, shape index: {}]
  %s2 = inlined_call_operand.vmem [shape: f32[1,32], index: 2, kind: input, shape index: {}]
  %s3 = inlined_call_operand.hbm [shape: f32[16,32], index: 3, kind: output, shape index: {}]
  %s4 = sld [smem:[#allocation0]]
  $region38: #{tpu_custom_call.1} parent=0
    _
  %s6 = ssub.s32 1, %s4
  %s7 = scalar_select 0, %s6, %s4
  $region1: #{tpu_custom_call.1} parent=0
    #allocation3 [shape = 'u8[8192]{0}', space=vmem, size = 0x2000, scoped, tag = 'input window, operand 0, single buffered']
    #allocation4 [shape = 's32[1]{0}', space=sflag, size = 0x4, scoped, tag = 'scoped memory for tpu_custom_call.1']
    #allocation5 [shape = 's32[1]{0}', space=sflag, size = 0x4, scoped, tag = 'scoped memory for tpu_custom_call.1']
    #allocation6 [shape = 'u8[16384]{0}', space=vmem, size = 0x4000, scoped, tag = 'input window, operand 1, single buffered']
    #allocation7 [shape = 's32[1]{0}', space=sflag, size = 0x4, scoped, tag = 'scoped memory for tpu_custom_call.1']
    #allocation8 [shape = 'u8[8192]{0}', space=vmem, size = 0x2000, scoped, tag = 'output window, operand 0, single buffered']
    %8 = vsyncpa [#allocation4], 0
    %9 = vsyncpa [#allocation7], 0
    %10 = vsyncpa [#allocation5], 0
    // Predicated region
    $region2: #{tpu_custom_call.1} parent=1 // pred_check
      _
    $region3: #{tpu_custom_call.1} parent=1 // pred_check_branch
      %12 = sbr.rel (0) target = $region5
    $region4: #{tpu_custom_call.1} parent=1 // pred_region
      %s14 = ssub.s32 256, 256
      %15 = vsyncadd [#allocation4], %s14
      %s16 = sshll.u32 [#allocation3], 4
      %s17 = int_to_ptr.vmem [resolvable:$true] %s16
      %22 = dma.hbm_to_vmem [thread:$0]  %s0, 256, %s17, [#allocation4], 128, 128, 8
    $region5: #{tpu_custom_call.1} parent=1 // pred_fallthru
      _
    // Predicated region
    $region6: #{tpu_custom_call.1} parent=1 // pred_check
      _
    $region7: #{tpu_custom_call.1} parent=1 // pred_check_branch
      %24 = sbr.rel (0) target = $region9
    $region8: #{tpu_custom_call.1} parent=1 // pred_region
      %s26 = ssub.s32 512, 512
      %27 = vsyncadd [#allocation7], %s26
      %s28 = sshll.u32 [#allocation6], 4
      %s29 = int_to_ptr.vmem [resolvable:$true] %s28
      %34 = dma.hbm_to_vmem [thread:$0]  %s1, 512, %s29, [#allocation7], 128, 128, 8
    $region9: #{tpu_custom_call.1} parent=1 // pred_fallthru
      _
    // Predicated region
    $region10: #{tpu_custom_call.1} parent=1 // pred_check
      _
    $region11: #{tpu_custom_call.1} parent=1 // pred_check_branch
      %36 = sbr.rel (0) target = $region13
    $region12: #{tpu_custom_call.1} parent=1 // pred_region
      _
    $region13: #{tpu_custom_call.1} parent=1 // pred_fallthru
      _
    // Predicated region
    $region14: #{tpu_custom_call.1} parent=1 // pred_check
      _
    $region15: #{tpu_custom_call.1} parent=1 // pred_check_branch
      %38 = sbr.rel (0) target = $region17
    $region16: #{tpu_custom_call.1} parent=1 // pred_region
      %39 = dma.done [#allocation4], 256
    $region17: #{tpu_custom_call.1} parent=1 // pred_fallthru
      _
    // Predicated region
    $region18: #{tpu_custom_call.1} parent=1 // pred_check
      _
    $region19: #{tpu_custom_call.1} parent=1 // pred_check_branch
      %41 = sbr.rel (0) target = $region21
    $region20: #{tpu_custom_call.1} parent=1 // pred_region
      %42 = dma.done [#allocation7], 512
    $region21: #{tpu_custom_call.1} parent=1 // pred_fallthru
      _
    %p43 = scmp.eq.s32.totalorder 0, 0
    // Predicated region
    $region22: #{tpu_custom_call.1} parent=1 // pred_check
      %p44 = pneg %p43
    $region23: #{tpu_custom_call.1} parent=1 // pred_check_branch
      %46 = sbr.rel (%p44) target = $region25
    $region24: #{tpu_custom_call.1} parent=1 // pred_region
      %v47 = vld [vmem:[%s2] sm:$0x1]
      %v49 = vlaneseq
      %v50 = vshrl.u32 %v49, 7
      %v51 = vsub.s32 0, %v50
      %v52 = vrot.slane %v47, %v51
      %vm54 = vcmask 261120
      %55 = vst.msk [vmem:[#allocation2] sm:$0xff] %vm54, %v52
      %56 = vst.msk [vmem:[#allocation2 + $0x8] sm:$0xff] %vm54, %v52
    $region25: #{tpu_custom_call.1} parent=1 // pred_fallthru
      _
    %v57 = vld [vmem:[#allocation2] sm:$0xff]
    %v58 = vld [vmem:[#allocation2 + $0x8] sm:$0xff]
    %v59 = vld [vmem:[#allocation3] sm:$0xff]
    %v60 = vld [vmem:[#allocation3 + $0x8] sm:$0xff]
    %v61 = vld [vmem:[#allocation6] sm:$0xff]
    %v62 = vld [vmem:[#allocation6 + $0x8] sm:$0xff]
    %v63 = vld [vmem:[#allocation6 + $0x10] sm:$0xff]
    %v64 = vld [vmem:[#allocation6 + $0x18] sm:$0xff]
    %vm65 = vcmask 261120
    %v67 = vsel %vm65, %v59, 0
    %v70 = vsel %vm65, %v60, 0
    %72 = vmatprep.subr.mxu0 0.0
    %73 = vmatpush1.msra.mxu0 %v61
    %74 = vmatprep.subr.mxu0 0.0
    %75 = vmatpush1.msra.mxu0 %v62
    %76 = vmatprep.subr.mxu0 0.0
    %77 = vmatpush1.msra.mxu0 %v63
    %78 = vmatprep.subr.mxu0 0.0
    %79 = vmatpush1.msra.mxu0 %v64
    %80 = vmatprep.subr.mxu0 0.0
    %81 = vmatpush1.msra.mxu0 0.0
    %82 = vmatprep.subr.mxu0 0.0
    %83 = vmatpush1.msra.mxu0 0.0
    %84 = vmatprep.subr.mxu0 0.0
    %85 = vmatpush1.msra.mxu0 0.0
    %86 = vmatprep.subr.mxu0 0.0
    %87 = vmatpush1.msra.mxu0 0.0
    %88 = vmatprep.subr.mxu0 0.0
    %89 = vmatpush1.msra.mxu0 0.0
    %90 = vmatprep.subr.mxu0 0.0
    %91 = vmatpush1.msra.mxu0 0.0
    %92 = vmatprep.subr.mxu0 0.0
    %93 = vmatpush1.msra.mxu0 0.0
    %94 = vmatprep.subr.mxu0 0.0
    %95 = vmatpush1.msra.mxu0 0.0
    %96 = vmatprep.subr.mxu0 0.0
    %97 = vmatpush1.msra.mxu0 0.0
    %98 = vmatprep.subr.mxu0 0.0
    %99 = vmatpush1.msra.mxu0 0.0
    %100 = vmatprep.subr.mxu0 0.0
    %101 = vmatpush1.msra.mxu0 0.0
    %102 = vmatprep.subr.mxu0 0.0
    %103 = vmatpush1.msra.mxu0 0.0
    %104 = vmatprep.subr.mxu0 0.0
    %105 = vmatpush1.msra.mxu0 0.0
    %106 = vmatprep.subr.mxu0 0.0
    %107 = vmatpush1.msra.mxu0 0.0
    %108 = vmatprep.subr.mxu0 0.0
    %109 = vmatpush1.msra.mxu0 0.0
    %110 = vmatprep.subr.mxu0 0.0
    %111 = vmatpush1.msra.mxu0 0.0
    %112 = vmatprep.subr.mxu0 0.0
    %113 = vmatpush1.msra.mxu0 0.0
    %114 = vmatprep.subr.mxu0 0.0
    %115 = vmatpush1.msra.mxu0 0.0
    %116 = vmatprep.subr.mxu0 0.0
    %117 = vmatpush1.msra.mxu0 0.0
    %118 = vmatprep.subr.mxu0 0.0
    %119 = vmatpush1.msra.mxu0 0.0
    %120 = vmatprep.subr.mxu0 0.0
    %121 = vmatpush1.msra.mxu0 0.0
    %122 = vmatprep.subr.mxu0 0.0
    %123 = vmatpush1.msra.mxu0 0.0
    %124 = vmatprep.subr.mxu0 0.0
    %125 = vmatpush1.msra.mxu0 0.0
    %126 = vmatprep.subr.mxu0 0.0
    %127 = vmatpush1.msra.mxu0 0.0
    %128 = vmatprep.subr.mxu0 0.0
    %129 = vmatpush1.msra.mxu0 0.0
    %130 = vmatprep.subr.mxu0 0.0
    %131 = vmatpush1.msra.mxu0 0.0
    %132 = vmatprep.subr.mxu0 0.0
    %133 = vmatpush1.msra.mxu0 0.0
    %134 = vmatprep.subr.mxu0 0.0
    %135 = vmatpush1.msra.mxu0 0.0
    %136 = vmatprep.mubr.f32.mxu0 0.0
    %137 = vmatmul.mubr.f32.gmra.mrb[0].mxu0 %v67
    %v138 = vpop.f32.mrb[0].mxu0
    %v139 = vadd.f32 0.0, %v138
    %v140 = vpop.f32.mrb[0].mxu0
    %141 = vmatprep.mubr.f32.mxu0 0.0
    %142 = vmatmul.mubr.f32.gmra.mrb[0].mxu0 %v70
    %v143 = vpop.f32.mrb[0].mxu0
    %v144 = vadd.f32 0.0, %v143
    %v145 = vpop.f32.mrb[0].mxu0
    %146 = vdwg.mxu0
    %v147 = vadd.f32 %v57, %v139
    %v148 = vadd.f32 %v58, %v144
    %149 = vst.msk [vmem:[#allocation2] sm:$0xff] %vm65, %v147
    %150 = vst.msk [vmem:[#allocation2 + $0x8] sm:$0xff] %vm65, %v148
    // Predicated region
    $region26: #{tpu_custom_call.1} parent=1 // pred_check
      %p151 = pneg %p43
    $region27: #{tpu_custom_call.1} parent=1 // pred_check_branch
      %153 = sbr.rel (%p151) target = $region29
    $region28: #{tpu_custom_call.1} parent=1 // pred_region
      %v154 = vld [vmem:[#allocation2] sm:$0xff]
      %v155 = vld [vmem:[#allocation2 + $0x8] sm:$0xff]
      %156 = vst.msk [vmem:[#allocation8] sm:$0xff] %vm65, %v154
      %157 = vst.msk [vmem:[#allocation8 + $0x8] sm:$0xff] %vm65, %v155
    $region29: #{tpu_custom_call.1} parent=1 // pred_fallthru
      _
    // Predicated region
    $region30: #{tpu_custom_call.1} parent=1 // pred_check
      _
    $region31: #{tpu_custom_call.1} parent=1 // pred_check_branch
      %159 = sbr.rel (0) target = $region33
    $region32: #{tpu_custom_call.1} parent=1 // pred_region
      %s161 = ssub.s32 256, 256
      %162 = vsyncadd [#allocation5], %s161
      %s163 = sshll.u32 [#allocation8], 4
      %s164 = int_to_ptr.vmem [resolvable:$true] %s163
      %169 = dma.vmem_to_hbm [thread:$0]  %s164, 256, %s3, [#allocation5], 128, 128, 8
    $region33: #{tpu_custom_call.1} parent=1 // pred_fallthru
      _
    // Predicated region
    $region34: #{tpu_custom_call.1} parent=1 // pred_check
      _
    $region35: #{tpu_custom_call.1} parent=1 // pred_check_branch
      %171 = sbr.rel (0) target = $region37
    $region36: #{tpu_custom_call.1} parent=1 // pred_region
      %172 = dma.done [#allocation5], 256
    $region37: #{tpu_custom_call.1} parent=1 // pred_fallthru
      _
    %173 = vsyncpa [#allocation4], 1
    %174 = vsyncpa [#allocation7], 1
    %175 = vsyncpa [#allocation5], 1

</llo_original>
